<compile_context>
chip_gen: v6e
topology: v6e:2x2x1
jax: 0.10.0
libtpu: 0.0.40
codegen_flags: <defaults>
</compile_context>

<pallas_src>
import functools

import jax
import jax.numpy as jnp
from jax.experimental import pallas as pl
from jax.experimental.pallas import tpu as pltpu


def hamiltonian_kernel(x_ref, w1_ref, b1_ref, w2_ref, msqrt_ref, o_ref, *, dim):
    x = x_ref[...]                 # [bb, 2*dim] — single tile load
    q = x[:, :dim]                 # static lane slices of the loaded tile
    p = x[:, dim:]

    # ---- Potential V(q): Linear -> tanh -> Linear(no bias) --------------------
    h = jnp.tanh(
        jnp.dot(q, w1_ref[...], preferred_element_type=jnp.float32) + b1_ref[...]
    )                                                                   # [bb, hidden]
    # lin2 has a single output column: VPU multiply + XLU lane reduce instead of
    # a 1-wide MXU matmul.
    v = jnp.sum(h * w2_ref[...], axis=-1, keepdims=True)                # [bb, 1]

    # ---- Kinetic T(p) = 0.5 * p M p^T, M = S S^T  ==  0.5 * ||p S||^2 ---------
    y = jnp.dot(p, msqrt_ref[...], preferred_element_type=jnp.float32)  # [bb, dim]
    t = 0.5 * jnp.sum(y * y, axis=-1, keepdims=True)                    # [bb, 1]

    # Narrow store: one f32 per row (4 B/row of HBM writeback).
    o_ref[...] = v + t


def _pick_block_b(B: int, max_block: int = 2048) -> int:
    """Batch tile: <= max_block rows, multiple of 8 sublanes, and (when B >= 16)
    at least 2 grid steps so the 'parallel' batch axis can use both v7x cores."""
    half = -(-B // 2)                       # ceil(B/2): aim for >= 2 grid steps
    b = max(8, min(max_block, half))
    return -(-b // 8) * 8                   # round up to a multiple of 8 sublanes


def newtonian_hamiltonian(x, w1, b1, w2, m_sqrt, *, dim):
    """x: [B, 2*dim] f32 -> [B, 1] f32.

    Weight layout ("math" layout):
      w1     : [dim, hidden]  (= PyTorch lin1.weight.T)
      b1     : [hidden]
      w2     : [hidden]       (= PyTorch lin2.weight row, no bias)
      m_sqrt : [dim, dim]
    """
    B = x.shape[0]
    hidden = w1.shape[1]
    b1_row = b1.reshape(1, hidden)
    w2_row = w2.reshape(1, hidden)

    block_b = _pick_block_b(B)
    num_blocks = -(-B // block_b)           # cdiv
    b_pad = num_blocks * block_b
    # Pad the batch (rows computed on zeros are finite and simply discarded);
    # avoids the old block_b = B fallback that could exceed scoped VMEM.
    x_in = x if b_pad == B else jnp.pad(x, ((0, b_pad - B), (0, 0)))

    kernel = functools.partial(hamiltonian_kernel, dim=dim)

    flops = b_pad * (2 * dim * hidden + 2 * hidden + 2 * dim * dim + 2 * dim)
    bytes_accessed = (b_pad * (2 * dim + 1) * 4
                      + (dim * hidden + 2 * hidden + dim * dim) * 4)

    out = pl.pallas_call(
        kernel,
        out_shape=jax.ShapeDtypeStruct((b_pad, 1), jnp.float32),
        grid_spec=pltpu.PrefetchScalarGridSpec(
            num_scalar_prefetch=0,
            grid=(num_blocks,),
            in_specs=[
                # q|p tile, pipelined over the batch grid
                pl.BlockSpec((block_b, 2 * dim), lambda i: (i, 0)),
                # grid-invariant weights: same block every step -> stay resident
                # (a few KiB here; re-derive / tile hidden if dim, hidden grow
                #  toward v7x's 64 MiB VMEM)
                pl.BlockSpec((dim, hidden), lambda i: (0, 0)),   # W1
                pl.BlockSpec((1, hidden), lambda i: (0, 0)),     # b1 row
                pl.BlockSpec((1, hidden), lambda i: (0, 0)),     # w2 row
                pl.BlockSpec((dim, dim), lambda i: (0, 0)),      # M_sqrt
            ],
            out_specs=pl.BlockSpec((block_b, 1), lambda i: (i, 0)),
        ),
        compiler_params=pltpu.CompilerParams(
            dimension_semantics=("parallel",),   # independent batch tiles
        ),
        cost_estimate=pl.CostEstimate(
            flops=flops,
            transcendentals=b_pad * hidden,
            bytes_accessed=bytes_accessed,
        ),
    )(x_in, w1, b1_row, w2_row, m_sqrt)

    return out[:B] if b_pad != B else out


# -------- deterministic parameter init (mirrors torch.nn.init.orthogonal_) -----
def orthogonal_init(key, shape):
    rows, cols = shape
    n = max(rows, cols)
    a = jax.random.normal(key, (n, n), dtype=jnp.float32)
    q, r = jnp.linalg.qr(a)
    d = jnp.diag(r)
    q = q * jnp.where(d >= 0, 1.0, -1.0)
    return q[:rows, :cols]


def reference_forward(x, w1, b1, w2, m_sqrt, *, dim):
    """Pure-JAX reference reproducing the PyTorch module semantics (explicit M)."""
    q = x[:, :dim]
    p = x[:, dim:]
    v = jnp.tanh(q @ w1 + b1.reshape(1, -1)) @ w2.reshape(-1, 1)         # [B, 1]
    M = m_sqrt @ m_sqrt.T
    t = 0.5 * jnp.sum((p @ M) * p, axis=-1, keepdims=True)               # [B, 1]
    return v + t


def _make_params(key, dim, hidden):
    k1, kb, k2, km = jax.random.split(key, 4)
    # lin1.weight [hidden, dim] orthogonal -> stored transposed as [dim, hidden]
    w1 = orthogonal_init(k1, (hidden, dim)).T
    # lin1.bias: PyTorch default uniform(-1/sqrt(dim), 1/sqrt(dim))
    bound = 1.0 / jnp.sqrt(jnp.float32(dim))
    b1 = jax.random.uniform(kb, (hidden,), dtype=jnp.float32,
                            minval=-bound, maxval=bound)
    # lin2.weight [1, hidden] orthogonal, no bias -> stored as a [hidden] row
    w2 = orthogonal_init(k2, (1, hidden)).reshape(hidden)
    # M_sqrt [dim, dim] orthogonal
    m_sqrt = orthogonal_init(km, (dim, dim))
    return w1, b1, w2, m_sqrt


if __name__ == "__main__":
    # Small shapes consistent with the module: x has in_dim = 2*dim columns.
    dim = 16          # module's self.dim = in_dim / 2
    hidden = 32

    key = jax.random.PRNGKey(0)
    kx, kx2, kp = jax.random.split(key, 3)
    w1, b1, w2, m_sqrt = _make_params(kp, dim, hidden)

    # Case 1: tiny divisible batch (single grid step).
    B = 8
    x = jax.random.normal(kx, (B, 2 * dim), dtype=jnp.float32)
    out = jax.block_until_ready(newtonian_hamiltonian(x, w1, b1, w2, m_sqrt, dim=dim))
    ref = reference_forward(x, w1, b1, w2, m_sqrt, dim=dim)
    assert out.shape == (B, 1), out.shape
    assert jnp.allclose(out, ref, atol=1e-5, rtol=1e-5), (out, ref)

    # Case 2: non-divisible batch exercising the cdiv/padding path and >=2 grid
    # steps (megacore sharding on v7x).
    B2 = 100
    x2 = jax.random.normal(kx2, (B2, 2 * dim), dtype=jnp.float32)
    out2 = jax.block_until_ready(newtonian_hamiltonian(x2, w1, b1, w2, m_sqrt, dim=dim))
    ref2 = reference_forward(x2, w1, b1, w2, m_sqrt, dim=dim)
    assert out2.shape == (B2, 1), out2.shape
    assert jnp.allclose(out2, ref2, atol=1e-5, rtol=1e-5), (out2, ref2)

    print("KERNEL_OK")
</pallas_src>

<mosaic_0001>
module attributes {stable_mosaic.version = 11 : i64} {
  func.func @hamiltonian_kernel(%arg0: i32, %arg1: memref<8x32xf32, #tpu.memory_space<vmem>>, %arg2: memref<16x32xf32, #tpu.memory_space<vmem>>, %arg3: memref<1x32xf32, #tpu.memory_space<vmem>>, %arg4: memref<1x32xf32, #tpu.memory_space<vmem>>, %arg5: memref<16x16xf32, #tpu.memory_space<vmem>>, %arg6: memref<8x1xf32, #tpu.memory_space<vmem>>) attributes {dimension_semantics = [#tpu.dimension_semantics<parallel>], iteration_bounds = array<i64: 1>, scalar_prefetch = 0 : i64, scratch_operands = 0 : i64, tpu.core_type = #tpu.core_type<tc>, window_params = [{transform_indices = @transform_0, window_bounds = array<i64: 8, 32>}, {pipeline_mode = #tpu.pipeline_mode<synchronous>, transform_indices = @transform_1, window_bounds = array<i64: 16, 32>}, {pipeline_mode = #tpu.pipeline_mode<synchronous>, transform_indices = @transform_2, window_bounds = array<i64: 1, 32>}, {pipeline_mode = #tpu.pipeline_mode<synchronous>, transform_indices = @transform_3, window_bounds = array<i64: 1, 32>}, {pipeline_mode = #tpu.pipeline_mode<synchronous>, transform_indices = @transform_4, window_bounds = array<i64: 16, 16>}, {transform_indices = @transform_5, window_bounds = array<i64: 8, 1>}]} {
    %c0 = arith.constant 0 : index
    %c0_0 = arith.constant 0 : index
    %0 = vector.load %arg1[%c0, %c0_0] : memref<8x32xf32, #tpu.memory_space<vmem>>, vector<8x32xf32>
    %1 = vector.extract_strided_slice %0 {offsets = [0, 0], sizes = [8, 16], strides = [1, 1]} : vector<8x32xf32> to vector<8x16xf32>
    %2 = vector.extract_strided_slice %0 {offsets = [0, 16], sizes = [8, 16], strides = [1, 1]} : vector<8x32xf32> to vector<8x16xf32>
    %c0_1 = arith.constant 0 : index
    %c0_2 = arith.constant 0 : index
    %3 = vector.load %arg2[%c0_1, %c0_2] : memref<16x32xf32, #tpu.memory_space<vmem>>, vector<16x32xf32>
    %cst = arith.constant dense<0.000000e+00> : vector<8x32xf32>
    %4 = tpu.matmul %1, %3, %cst {dimension_numbers = #tpu.dot_dimension_numbers<[1], [0], [0], [1], [0, 0, 1, 1], [], []>} : vector<8x16xf32>, vector<16x32xf32>, vector<8x32xf32> -> vector<8x32xf32>
    %c0_3 = arith.constant 0 : index
    %c0_4 = arith.constant 0 : index
    %5 = vector.load %arg3[%c0_3, %c0_4] : memref<1x32xf32, #tpu.memory_space<vmem>>, vector<1x32xf32>
    %6 = vector.broadcast %5 : vector<1x32xf32> to vector<8x32xf32>
    %7 = arith.addf %4, %6 : vector<8x32xf32>
    %8 = math.tanh %7 : vector<8x32xf32>
    %c0_5 = arith.constant 0 : index
    %c0_6 = arith.constant 0 : index
    %9 = vector.load %arg4[%c0_5, %c0_6] : memref<1x32xf32, #tpu.memory_space<vmem>>, vector<1x32xf32>
    %10 = vector.broadcast %9 : vector<1x32xf32> to vector<8x32xf32>
    %11 = arith.mulf %8, %10 : vector<8x32xf32>
    %cst_7 = arith.constant dense<0.000000e+00> : vector<8xf32>
    %12 = vector.multi_reduction <add>, %11, %cst_7 [1] : vector<8x32xf32> to vector<8xf32>
    %13 = vector.shape_cast %12 : vector<8xf32> to vector<8x1xf32>
    %c0_8 = arith.constant 0 : index
    %c0_9 = arith.constant 0 : index
    %14 = vector.load %arg5[%c0_8, %c0_9] : memref<16x16xf32, #tpu.memory_space<vmem>>, vector<16x16xf32>
    %cst_10 = arith.constant dense<0.000000e+00> : vector<8x16xf32>
    %15 = tpu.matmul %2, %14, %cst_10 {dimension_numbers = #tpu.dot_dimension_numbers<[1], [0], [0], [1], [0, 0, 1, 1], [], []>} : vector<8x16xf32>, vector<16x16xf32>, vector<8x16xf32> -> vector<8x16xf32>
    %16 = arith.mulf %15, %15 : vector<8x16xf32>
    %cst_11 = arith.constant dense<0.000000e+00> : vector<8xf32>
    %17 = vector.multi_reduction <add>, %16, %cst_11 [1] : vector<8x16xf32> to vector<8xf32>
    %18 = vector.shape_cast %17 : vector<8xf32> to vector<8x1xf32>
    %cst_12 = arith.constant 5.000000e-01 : f32
    %19 = vector.broadcast %cst_12 : f32 to vector<8x1xf32>
    %20 = arith.mulf %19, %18 : vector<8x1xf32>
    %21 = arith.addf %13, %20 : vector<8x1xf32>
    %c0_13 = arith.constant 0 : index
    %c0_14 = arith.constant 0 : index
    %22 = vector.load %arg6[%c0_13, %c0_14] : memref<8x1xf32, #tpu.memory_space<vmem>>, vector<8x1xf32>
    tpu.vector_store %arg6[%c0_13, %c0_14], %21 {strides = array<i32>} : memref<8x1xf32, #tpu.memory_space<vmem>>, vector<8x1xf32>,
    return
  }
  func.func @transform_0(%arg0: i32) -> (i32, i32) {
    %c0_i32 = arith.constant 0 : i32
    %c0_i32_0 = arith.constant 0 : i32
    return %arg0, %c0_i32 : i32, i32
  }
  func.func @transform_1(%arg0: i32) -> (i32, i32) {
    %c0_i32 = arith.constant 0 : i32
    %c0_i32_0 = arith.constant 0 : i32
    %c0_i32_1 = arith.constant 0 : i32
    return %c0_i32, %c0_i32_0 : i32, i32
  }
  func.func @transform_2(%arg0: i32) -> (i32, i32) {
    %c0_i32 = arith.constant 0 : i32
    %c0_i32_0 = arith.constant 0 : i32
    %c0_i32_1 = arith.constant 0 : i32
    return %c0_i32, %c0_i32_0 : i32, i32
  }
  func.func @transform_3(%arg0: i32) -> (i32, i32) {
    %c0_i32 = arith.constant 0 : i32
    %c0_i32_0 = arith.constant 0 : i32
    %c0_i32_1 = arith.constant 0 : i32
    return %c0_i32, %c0_i32_0 : i32, i32
  }
  func.func @transform_4(%arg0: i32) -> (i32, i32) {
    %c0_i32 = arith.constant 0 : i32
    %c0_i32_0 = arith.constant 0 : i32
    %c0_i32_1 = arith.constant 0 : i32
    return %c0_i32, %c0_i32_0 : i32, i32
  }
  func.func @transform_5(%arg0: i32) -> (i32, i32) {
    %c0_i32 = arith.constant 0 : i32
    %c0_i32_0 = arith.constant 0 : i32
    return %arg0, %c0_i32 : i32, i32
  }
}

</mosaic_0001>

<llo_original>
// kernel: tpu_custom_call.1
$region0: #{tpu_custom_call.1}
  #allocation0 [shape = 'u32[]', space=smem, size = 0x4, offset = 0x4, fixed_abs, tag = 'smem constant byte address 0x4 - core index']
  #allocation1 [shape = 'u32[144,128]{1,0:T(1,128)}', space=vmem, size = 0x12000, scoped, tag = 'internal scratch']
  %s0 = inlined_call_operand.hbm [shape: f32[8,32], index: 0, kind: input, shape index: {}]
  %s1 = inlined_call_operand.hbm [shape: f32[16,32], index: 1, kind: input, shape index: {}]
  %s2 = inlined_call_operand.vmem [shape: f32[1,32], index: 2, kind: input, shape index: {}]
  %s3 = inlined_call_operand.vmem [shape: f32[1,32], index: 3, kind: input, shape index: {}]
  %s4 = inlined_call_operand.hbm [shape: f32[16,16], index: 4, kind: input, shape index: {}]
  %s5 = inlined_call_operand.vmem [shape: f32[8,1], index: 5, kind: output, shape index: {}]
  %s6 = sld [smem:[#allocation0]]
  $region42: #{tpu_custom_call.1} parent=0
    _
  %s8 = ssub.s32 1, %s6
  %s9 = scalar_select 0, %s8, %s6
  $region1: #{tpu_custom_call.1} parent=0
    #allocation2 [shape = 'u8[4096]{0}', space=vmem, size = 0x1000, scoped, tag = 'input window, operand 0, single buffered']
    #allocation3 [shape = 's32[1]{0}', space=sflag, size = 0x4, scoped, tag = 'scoped memory for tpu_custom_call.1']
    #allocation4 [shape = 'u8[8192]{0}', space=vmem, size = 0x2000, scoped, tag = 'input window, operand 1, single buffered']
    #allocation5 [shape = 's32[1]{0}', space=sflag, size = 0x4, scoped, tag = 'scoped memory for tpu_custom_call.1']
    #allocation6 [shape = 'u8[8192]{0}', space=vmem, size = 0x2000, scoped, tag = 'input window, operand 4, single buffered']
    %10 = vsyncpa [#allocation3], 0
    %11 = vsyncpa [#allocation5], 0
    // Predicated region
    $region2: #{tpu_custom_call.1} parent=1 // pred_check
      _
    $region3: #{tpu_custom_call.1} parent=1 // pred_check_branch
      %13 = sbr.rel (0) target = $region5
    $region4: #{tpu_custom_call.1} parent=1 // pred_region
      %s15 = ssub.s32 128, 128
      %16 = vsyncadd [#allocation3], %s15
      %s18 = sshll.u32 [#allocation2], 4
      %s19 = int_to_ptr.vmem [resolvable:$true] %s18
      %21 = dma.hbm_to_vmem [thread:$0]  %s0, 128, %s19, [#allocation3]
    $region5: #{tpu_custom_call.1} parent=1 // pred_fallthru
      _
    // Predicated region
    $region6: #{tpu_custom_call.1} parent=1 // pred_check
      _
    $region7: #{tpu_custom_call.1} parent=1 // pred_check_branch
      %23 = sbr.rel (0) target = $region9
    $region8: #{tpu_custom_call.1} parent=1 // pred_region
      %s25 = ssub.s32 256, 256
      %26 = vsyncadd [#allocation5], %s25
      %s27 = sshll.u32 [#allocation4], 4
      %s28 = int_to_ptr.vmem [resolvable:$true] %s27
      %33 = dma.hbm_to_vmem [thread:$0]  %s1, 256, %s28, [#allocation5], 128, 128, 8
    $region9: #{tpu_custom_call.1} parent=1 // pred_fallthru
      _
    // Predicated region
    $region10: #{tpu_custom_call.1} parent=1 // pred_check
      _
    $region11: #{tpu_custom_call.1} parent=1 // pred_check_branch
      %35 = sbr.rel (0) target = $region13
    $region12: #{tpu_custom_call.1} parent=1 // pred_region
      _
    $region13: #{tpu_custom_call.1} parent=1 // pred_fallthru
      _
    // Predicated region
    $region14: #{tpu_custom_call.1} parent=1 // pred_check
      _
    $region15: #{tpu_custom_call.1} parent=1 // pred_check_branch
      %37 = sbr.rel (0) target = $region17
    $region16: #{tpu_custom_call.1} parent=1 // pred_region
      _
    $region17: #{tpu_custom_call.1} parent=1 // pred_fallthru
      _
    // Predicated region
    $region18: #{tpu_custom_call.1} parent=1 // pred_check
      _
    $region19: #{tpu_custom_call.1} parent=1 // pred_check_branch
      %39 = sbr.rel (0) target = $region21
    $region20: #{tpu_custom_call.1} parent=1 // pred_region
      %s41 = ssub.s32 256, 256
      %42 = vsyncadd [#allocation5], %s41
      %s43 = sshll.u32 [#allocation6], 4
      %s44 = int_to_ptr.vmem [resolvable:$true] %s43
      %49 = dma.hbm_to_vmem [thread:$0]  %s4, 256, %s44, [#allocation5], 128, 128, 8
    $region21: #{tpu_custom_call.1} parent=1 // pred_fallthru
      _
    // Predicated region
    $region22: #{tpu_custom_call.1} parent=1 // pred_check
      _
    $region23: #{tpu_custom_call.1} parent=1 // pred_check_branch
      %51 = sbr.rel (0) target = $region25
    $region24: #{tpu_custom_call.1} parent=1 // pred_region
      %52 = dma.done [#allocation3], 128
    $region25: #{tpu_custom_call.1} parent=1 // pred_fallthru
      _
    // Predicated region
    $region26: #{tpu_custom_call.1} parent=1 // pred_check
      _
    $region27: #{tpu_custom_call.1} parent=1 // pred_check_branch
      %54 = sbr.rel (0) target = $region29
    $region28: #{tpu_custom_call.1} parent=1 // pred_region
      %55 = dma.done [#allocation5], 256
    $region29: #{tpu_custom_call.1} parent=1 // pred_fallthru
      _
    // Predicated region
    $region30: #{tpu_custom_call.1} parent=1 // pred_check
      _
    $region31: #{tpu_custom_call.1} parent=1 // pred_check_branch
      %57 = sbr.rel (0) target = $region33
    $region32: #{tpu_custom_call.1} parent=1 // pred_region
      %58 = dma.done [#allocation5], 256
    $region33: #{tpu_custom_call.1} parent=1 // pred_fallthru
      _
    %v59 = vld [vmem:[#allocation2] sm:$0xff]
    %v60 = vld [vmem:[#allocation4] sm:$0xff]
    %v61 = vld [vmem:[#allocation4 + $0x8] sm:$0xff]
    %v62 = vld [vmem:[%s2] sm:$0x1]
    %v64 = vlaneseq
    %v65 = vshrl.u32 %v64, 7
    %v66 = vsub.s32 0, %v65
    %v67 = vrot.slane %v62, %v66
    %vm69 = vcmask 130048
    %v71 = vsel %vm69, %v59, 0
    %73 = vmatprep.subr.mxu0 0.0
    %74 = vmatpush1.msra.mxu0 0.0
    %75 = vmatprep.subr.mxu0 0.0
    %76 = vmatpush1.msra.mxu0 0.0
    %77 = vmatprep.subr.mxu0 0.0
    %78 = vmatpush1.msra.mxu0 0.0
    %79 = vmatprep.subr.mxu0 0.0
    %80 = vmatpush1.msra.mxu0 0.0
    %81 = vmatprep.subr.mxu0 0.0
    %82 = vmatpush1.msra.mxu0 0.0
    %83 = vmatprep.subr.mxu0 0.0
    %84 = vmatpush1.msra.mxu0 0.0
    %85 = vmatprep.subr.mxu0 0.0
    %86 = vmatpush1.msra.mxu0 0.0
    %87 = vmatprep.subr.mxu0 0.0
    %88 = vmatpush1.msra.mxu0 0.0
    %89 = vmatprep.subr.mxu0 0.0
    %90 = vmatpush1.msra.mxu0 0.0
    %91 = vmatprep.subr.mxu0 0.0
    %92 = vmatpush1.msra.mxu0 0.0
    %93 = vmatprep.subr.mxu0 0.0
    %94 = vmatpush1.msra.mxu0 0.0
    %95 = vmatprep.subr.mxu0 0.0
    %96 = vmatpush1.msra.mxu0 0.0
    %97 = vmatprep.subr.mxu0 0.0
    %98 = vmatpush1.msra.mxu0 0.0
    %99 = vmatprep.subr.mxu0 0.0
    %100 = vmatpush1.msra.mxu0 0.0
    %101 = vmatprep.subr.mxu0 0.0
    %102 = vmatpush1.msra.mxu0 %v61
    %103 = vmatprep.subr.mxu0 0.0
    %104 = vmatpush1.msra.mxu0 %v60
    %105 = vmatprep.subr.mxu0 0.0
    %106 = vmatpush2.msra.mxu0 0.0
    %107 = vmatprep.subr.mxu0 0.0
    %108 = vmatpush2.msra.mxu0 0.0
    %109 = vmatprep.subr.mxu0 0.0
    %110 = vmatpush2.msra.mxu0 0.0
    %111 = vmatprep.subr.mxu0 0.0
    %112 = vmatpush2.msra.mxu0 0.0
    %113 = vmatprep.subr.mxu0 0.0
    %114 = vmatpush2.msra.mxu0 0.0
    %115 = vmatprep.subr.mxu0 0.0
    %116 = vmatpush2.msra.mxu0 0.0
    %117 = vmatprep.subr.mxu0 0.0
    %118 = vmatpush2.msra.mxu0 0.0
    %119 = vmatprep.subr.mxu0 0.0
    %120 = vmatpush2.msra.mxu0 0.0
    %121 = vmatprep.subr.mxu0 0.0
    %122 = vmatpush2.msra.mxu0 0.0
    %123 = vmatprep.subr.mxu0 0.0
    %124 = vmatpush2.msra.mxu0 0.0
    %125 = vmatprep.subr.mxu0 0.0
    %126 = vmatpush2.msra.mxu0 0.0
    %127 = vmatprep.subr.mxu0 0.0
    %128 = vmatpush2.msra.mxu0 0.0
    %129 = vmatprep.subr.mxu0 0.0
    %130 = vmatpush2.msra.mxu0 0.0
    %131 = vmatprep.subr.mxu0 0.0
    %132 = vmatpush2.msra.mxu0 0.0
    %133 = vmatprep.subr.mxu0 0.0
    %134 = vmatpush2.msra.mxu0 0.0
    %135 = vmatprep.subr.mxu0 0.0
    %136 = vmatpush2.msra.mxu0 0.0
    %137 = vmatprep.mubr.f32.mxu0 0.0
    %138 = vmatmul.mubr.f32.gmra.mxu0 %v71
    %v139 = vpop.f32.mrf.mxu0
    %v140 = vadd.f32 %v67, %v139
    %v141 = vpop.f32.mrf.mxu0
    %142 = vdwg.mxu0
    %v143 = vtanh.pop %v140
    %v144 = vld [vmem:[%s3] sm:$0x1]
    %v146 = vlaneseq
    %v147 = vshrl.u32 %v146, 7
    %v148 = vsub.s32 0, %v147
    %v149 = vrot.slane %v144, %v148
    %v151 = vmul.f32 %v143, %v149
    %vm152 = vcmask 261120
    %v153 = vsel %vm152, %v151, 0.0
    %154 = vadd.xlane.f32.xlu0 %v153
    %v155 = vpop.xlane.xlu0 %154
    %v156 = vld [vmem:[#allocation6] sm:$0xff]
    %v157 = vld [vmem:[#allocation6 + $0x8] sm:$0xff]
    %158 = vrot.lane.b32.xlu0 %v59, 112
    %v159 = vpop.permute.xlu0 %158
    %v160 = vsel %vm69, %v159, 0
    %162 = vmatprep.subr.mxu0 0.0
    %163 = vmatpush1.msra.mxu0 0.0
    %164 = vmatprep.subr.mxu0 0.0
    %165 = vmatpush1.msra.mxu0 0.0
    %166 = vmatprep.subr.mxu0 0.0
    %167 = vmatpush1.msra.mxu0 0.0
    %168 = vmatprep.subr.mxu0 0.0
    %169 = vmatpush1.msra.mxu0 0.0
    %170 = vmatprep.subr.mxu0 0.0
    %171 = vmatpush1.msra.mxu0 0.0
    %172 = vmatprep.subr.mxu0 0.0
    %173 = vmatpush1.msra.mxu0 0.0
    %174 = vmatprep.subr.mxu0 0.0
    %175 = vmatpush1.msra.mxu0 0.0
    %176 = vmatprep.subr.mxu0 0.0
    %177 = vmatpush1.msra.mxu0 0.0
    %178 = vmatprep.subr.mxu0 0.0
    %179 = vmatpush1.msra.mxu0 0.0
    %180 = vmatprep.subr.mxu0 0.0
    %181 = vmatpush1.msra.mxu0 0.0
    %182 = vmatprep.subr.mxu0 0.0
    %183 = vmatpush1.msra.mxu0 0.0
    %184 = vmatprep.subr.mxu0 0.0
    %185 = vmatpush1.msra.mxu0 0.0
    %186 = vmatprep.subr.mxu0 0.0
    %187 = vmatpush1.msra.mxu0 0.0
    %188 = vmatprep.subr.mxu0 0.0
    %189 = vmatpush1.msra.mxu0 0.0
    %190 = vmatprep.subr.mxu0 0.0
    %191 = vmatpush1.msra.mxu0 %v157
    %192 = vmatprep.subr.mxu0 0.0
    %193 = vmatpush1.msra.mxu0 %v156
    %194 = vmatprep.subr.mxu0 0.0
    %195 = vmatpush2.msra.mxu0 0.0
    %196 = vmatprep.subr.mxu0 0.0
    %197 = vmatpush2.msra.mxu0 0.0
    %198 = vmatprep.subr.mxu0 0.0
    %199 = vmatpush2.msra.mxu0 0.0
    %200 = vmatprep.subr.mxu0 0.0
    %201 = vmatpush2.msra.mxu0 0.0
    %202 = vmatprep.subr.mxu0 0.0
    %203 = vmatpush2.msra.mxu0 0.0
    %204 = vmatprep.subr.mxu0 0.0
    %205 = vmatpush2.msra.mxu0 0.0
    %206 = vmatprep.subr.mxu0 0.0
    %207 = vmatpush2.msra.mxu0 0.0
    %208 = vmatprep.subr.mxu0 0.0
    %209 = vmatpush2.msra.mxu0 0.0
    %210 = vmatprep.subr.mxu0 0.0
    %211 = vmatpush2.msra.mxu0 0.0
    %212 = vmatprep.subr.mxu0 0.0
    %213 = vmatpush2.msra.mxu0 0.0
    %214 = vmatprep.subr.mxu0 0.0
    %215 = vmatpush2.msra.mxu0 0.0
    %216 = vmatprep.subr.mxu0 0.0
    %217 = vmatpush2.msra.mxu0 0.0
    %218 = vmatprep.subr.mxu0 0.0
    %219 = vmatpush2.msra.mxu0 0.0
    %220 = vmatprep.subr.mxu0 0.0
    %221 = vmatpush2.msra.mxu0 0.0
    %222 = vmatprep.subr.mxu0 0.0
    %223 = vmatpush2.msra.mxu0 0.0
    %224 = vmatprep.subr.mxu0 0.0
    %225 = vmatpush2.msra.mxu0 0.0
    %226 = vmatprep.mubr.f32.mxu0 0.0
    %227 = vmatmul.mubr.f32.gmra.mxu0 %v160
    %v228 = vpop.f32.mrf.mxu0
    %v229 = vadd.f32 0.0, %v228
    %v230 = vpop.f32.mrf.mxu0
    %231 = vdwg.mxu0
    %v232 = vmul.f32 %v229, %v229
    %v233 = vsel %vm69, %v232, 0.0
    %234 = vadd.xlane.f32.xlu0 %v233
    %v235 = vpop.xlane.xlu0 %234
    %v236 = vmul.f32 %v235, 0.5
    %v237 = vadd.f32 %v155, %v236
    %vm238 = vcmask 7168
    %239 = vst.msk [vmem:[%s5] sm:$0xff] %vm238, %v237
    // Predicated region
    $region34: #{tpu_custom_call.1} parent=1 // pred_check
      _
    $region35: #{tpu_custom_call.1} parent=1 // pred_check_branch
      %241 = sbr.rel (0) target = $region37
    $region36: #{tpu_custom_call.1} parent=1 // pred_region
      _
    $region37: #{tpu_custom_call.1} parent=1 // pred_fallthru
      _
    // Predicated region
    $region38: #{tpu_custom_call.1} parent=1 // pred_check
      _
    $region39: #{tpu_custom_call.1} parent=1 // pred_check_branch
      %243 = sbr.rel (0) target = $region41
    $region40: #{tpu_custom_call.1} parent=1 // pred_region
      _
    $region41: #{tpu_custom_call.1} parent=1 // pred_fallthru
      _
    %244 = vsyncpa [#allocation3], 1
    %245 = vsyncpa [#allocation5], 1

</llo_original>
